<compile_context>
chip_gen: v7x
topology: tpu7x:2x2x1
jax: 0.10.0
libtpu: 0.0.40
codegen_flags: <defaults>
</compile_context>

<pallas_src>
import math

import jax
import jax.numpy as jnp
from jax.experimental import pallas as pl
from jax.experimental.pallas import tpu as pltpu

NEG_SLOPE = 0.01                 # nn.LeakyReLU() default
IN_FEATURES = 28 * 28            # 784 (full array dim -> legal lane extent)
OUT_FEATURES = 10
OUT_PADDED = 128                 # lane-dense output slab
HIDDEN = (64, 32, 16)


def _leaky_relu(x):
    return jnp.where(x > 0, x, NEG_SLOPE * x)


def mlp_kernel(x_ref, w1_ref, b1_ref, w2_ref, b2_ref,
               w3_ref, b3_ref, w4_ref, b4_ref, o_ref):
    # x streamed as f32 (one HBM pass); cast to bf16 just before the MXU.
    x = x_ref[...].astype(jnp.bfloat16)                          # (TB, 784)

    h = jnp.dot(x, w1_ref[...], preferred_element_type=jnp.float32) + b1_ref[...]
    h = _leaky_relu(h)

    h = jnp.dot(h.astype(jnp.bfloat16), w2_ref[...],
                preferred_element_type=jnp.float32) + b2_ref[...]
    h = _leaky_relu(h)

    h = jnp.dot(h.astype(jnp.bfloat16), w3_ref[...],
                preferred_element_type=jnp.float32) + b3_ref[...]
    h = _leaky_relu(h)

    logits = jnp.dot(h.astype(jnp.bfloat16), w4_ref[...],
                     preferred_element_type=jnp.float32) + b4_ref[...]  # (TB,128)

    # Masked, exactly-normalized softmax over the 10 real classes.  Pad lanes
    # (10..127) are forced to probability 0 regardless of their logit values,
    # and the denominator uses an exact divide (no approx reciprocal), so
    # rows of the returned [:, :10] slice sum to 1 up to f32 rounding.
    lane = jax.lax.broadcasted_iota(jnp.int32, logits.shape, 1)
    valid = lane < OUT_FEATURES
    masked = jnp.where(valid, logits, jnp.float32(-1e30))
    m = jnp.max(masked, axis=-1, keepdims=True)
    e = jnp.where(valid, jnp.exp(logits - m), jnp.float32(0.0))
    denom = jnp.sum(e, axis=-1, keepdims=True)
    o_ref[...] = (e / denom).astype(o_ref.dtype)


def simple_nn_forward(x_nchw, params, *, tb=1024):
    """x_nchw: (B, 1, 28, 28) float32 -> (B, 10) softmax probabilities."""
    B = x_nchw.shape[0]
    x = x_nchw.reshape(B, IN_FEATURES)            # f32 view; no cast/pad pass

    (w1, b1, w2, b2, w3, b3, w4, b4) = params

    # Batch tile: multiple of 8 sublanes (f32 input), large default so the
    # ~0.35us per-grid-step overhead is amortized, and capped so the grid has
    # >= 2 steps once the batch is big enough (v7x: 2 TensorCores share the
    # "parallel" batch axis).  At TB=1024 the double-buffered f32 x tile
    # (~6.3 MiB) + f32 out tile (~1 MiB) + resident weights fit comfortably
    # inside the default scoped VMEM on v5e/v6e/v7x.
    B8 = max(8, pl.cdiv(B, 8) * 8)
    TB = max(8, (min(tb, B8) // 8) * 8)
    if B8 >= 32:
        TB = min(TB, max(8, ((B8 // 2) // 8) * 8))
    Bp = pl.cdiv(B, TB) * TB
    if Bp != B:
        x = jnp.pad(x, ((0, Bp - B), (0, 0)))     # zero rows, sliced off below

    grid = (Bp // TB,)

    def const(i):
        return (0, 0)

    matmul_flops = 2 * Bp * (IN_FEATURES * HIDDEN[0] + HIDDEN[0] * HIDDEN[1]
                             + HIDDEN[1] * HIDDEN[2] + HIDDEN[2] * OUT_PADDED)
    weight_bytes = 2 * (IN_FEATURES * HIDDEN[0] + HIDDEN[0] * HIDDEN[1]
                        + HIDDEN[1] * HIDDEN[2] + HIDDEN[2] * OUT_PADDED)
    bias_bytes = 4 * (HIDDEN[0] + HIDDEN[1] + HIDDEN[2] + OUT_PADDED)
    cost = pl.CostEstimate(
        flops=matmul_flops,
        transcendentals=Bp * OUT_PADDED,
        bytes_accessed=Bp * IN_FEATURES * 4 + Bp * OUT_PADDED * 4
                       + weight_bytes + bias_bytes,
    )

    out = pl.pallas_call(
        mlp_kernel,
        out_shape=jax.ShapeDtypeStruct((Bp, OUT_PADDED), jnp.float32),
        grid=grid,
        in_specs=[
            pl.BlockSpec((TB, IN_FEATURES), lambda i: (i, 0)),   # x: batch-tiled
            pl.BlockSpec(w1.shape, const), pl.BlockSpec(b1.shape, const),
            pl.BlockSpec(w2.shape, const), pl.BlockSpec(b2.shape, const),
            pl.BlockSpec(w3.shape, const), pl.BlockSpec(b3.shape, const),
            pl.BlockSpec(w4.shape, const), pl.BlockSpec(b4.shape, const),
        ],
        out_specs=pl.BlockSpec((TB, OUT_PADDED), lambda i: (i, 0)),
        compiler_params=pltpu.CompilerParams(
            dimension_semantics=("parallel",)),
        cost_estimate=cost,
    )(x, w1, b1, w2, b2, w3, b3, w4, b4)

    return out[:B, :OUT_FEATURES]


def init_params(key):
    """Deterministic Kaiming-uniform (nonlinearity='leaky_relu', a=0) weights,
    zero biases — matching SimpleNN.reset_parameters().  Weights stored as
    (in, out) bf16; layer-4 weight/bias zero-padded to 128 output lanes (the
    kernel masks pad lanes to probability 0, so pad values never matter)."""
    dims = [(IN_FEATURES, HIDDEN[0]), (HIDDEN[0], HIDDEN[1]),
            (HIDDEN[1], HIDDEN[2]), (HIDDEN[2], OUT_FEATURES)]
    keys = jax.random.split(key, len(dims))
    params = []
    for idx, (k, (fan_in, fan_out)) in enumerate(zip(keys, dims)):
        gain = math.sqrt(2.0)                   # calculate_gain('leaky_relu', 0)
        bound = gain * math.sqrt(3.0 / fan_in)
        w = jax.random.uniform(k, (fan_in, fan_out), jnp.float32, -bound, bound)
        b = jnp.zeros((1, fan_out), jnp.float32)
        if idx == 3:                            # pad classes 10 -> 128 (zeros)
            w = jnp.pad(w, ((0, 0), (0, OUT_PADDED - OUT_FEATURES)))
            b = jnp.pad(b, ((0, 0), (0, OUT_PADDED - OUT_FEATURES)))
        params.extend([w.astype(jnp.bfloat16), b])   # weights bf16, biases f32
    return tuple(params)


def ref_forward(x_nchw, params):
    """Pure-JAX reference with the same bf16 casts (for correctness check)."""
    (w1, b1, w2, b2, w3, b3, w4, b4) = params
    B = x_nchw.shape[0]
    x = x_nchw.reshape(B, IN_FEATURES).astype(jnp.bfloat16)
    h = _leaky_relu(jnp.dot(x, w1, preferred_element_type=jnp.float32) + b1)
    h = _leaky_relu(jnp.dot(h.astype(jnp.bfloat16), w2,
                            preferred_element_type=jnp.float32) + b2)
    h = _leaky_relu(jnp.dot(h.astype(jnp.bfloat16), w3,
                            preferred_element_type=jnp.float32) + b3)
    logits = jnp.dot(h.astype(jnp.bfloat16), w4,
                     preferred_element_type=jnp.float32) + b4
    return jax.nn.softmax(logits[:, :OUT_FEATURES], axis=-1)


if __name__ == "__main__":
    key = jax.random.PRNGKey(0)
    pkey, xkey = jax.random.split(key)

    params = init_params(pkey)

    # Small canonical input, same layout as the PyTorch module expects.
    x = jax.random.normal(xkey, (2, 1, 28, 28), dtype=jnp.float32)
    out = jax.block_until_ready(simple_nn_forward(x, params))
    assert out.shape == (2, OUT_FEATURES)
    # Exact divide + masked pad lanes => rows sum to 1 up to f32 rounding.
    assert bool(jnp.allclose(jnp.sum(out, axis=1), 1.0, atol=1e-3))
    ref = jax.block_until_ready(ref_forward(x, params))
    assert bool(jnp.allclose(out, ref, atol=2e-3))

    # Exercise the multi-step batch grid + batch-padding path (grid > 1).
    x2 = jax.random.normal(xkey, (40, 1, 28, 28), dtype=jnp.float32)
    out2 = jax.block_until_ready(simple_nn_forward(x2, params, tb=16))
    assert out2.shape == (40, OUT_FEATURES)
    assert bool(jnp.allclose(jnp.sum(out2, axis=1), 1.0, atol=1e-3))
    assert bool(jnp.allclose(out2, ref_forward(x2, params), atol=2e-3))

    print("KERNEL_OK")
</pallas_src>

<mosaic_0001>
module attributes {stable_mosaic.version = 11 : i64} {
  func.func @mlp_kernel(%arg0: i32, %arg1: memref<8x784xf32, #tpu.memory_space<vmem>>, %arg2: memref<784x64xbf16, #tpu.memory_space<vmem>>, %arg3: memref<1x64xf32, #tpu.memory_space<vmem>>, %arg4: memref<64x32xbf16, #tpu.memory_space<vmem>>, %arg5: memref<1x32xf32, #tpu.memory_space<vmem>>, %arg6: memref<32x16xbf16, #tpu.memory_space<vmem>>, %arg7: memref<1x16xf32, #tpu.memory_space<vmem>>, %arg8: memref<16x128xbf16, #tpu.memory_space<vmem>>, %arg9: memref<1x128xf32, #tpu.memory_space<vmem>>, %arg10: memref<8x128xf32, #tpu.memory_space<vmem>>) attributes {dimension_semantics = [#tpu.dimension_semantics<parallel>], iteration_bounds = array<i64: 1>, scalar_prefetch = 0 : i64, scratch_operands = 0 : i64, tpu.core_type = #tpu.core_type<tc>, window_params = [{transform_indices = @transform_0, window_bounds = array<i64: 8, 784>}, {pipeline_mode = #tpu.pipeline_mode<synchronous>, transform_indices = @transform_1, window_bounds = array<i64: 784, 64>}, {pipeline_mode = #tpu.pipeline_mode<synchronous>, transform_indices = @transform_2, window_bounds = array<i64: 1, 64>}, {pipeline_mode = #tpu.pipeline_mode<synchronous>, transform_indices = @transform_3, window_bounds = array<i64: 64, 32>}, {pipeline_mode = #tpu.pipeline_mode<synchronous>, transform_indices = @transform_4, window_bounds = array<i64: 1, 32>}, {pipeline_mode = #tpu.pipeline_mode<synchronous>, transform_indices = @transform_5, window_bounds = array<i64: 32, 16>}, {pipeline_mode = #tpu.pipeline_mode<synchronous>, transform_indices = @transform_6, window_bounds = array<i64: 1, 16>}, {pipeline_mode = #tpu.pipeline_mode<synchronous>, transform_indices = @transform_7, window_bounds = array<i64: 16, 128>}, {pipeline_mode = #tpu.pipeline_mode<synchronous>, transform_indices = @transform_8, window_bounds = array<i64: 1, 128>}, {transform_indices = @transform_9, window_bounds = array<i64: 8, 128>}]} {
    %c0 = arith.constant 0 : index
    %c0_0 = arith.constant 0 : index
    %0 = vector.load %arg1[%c0, %c0_0] : memref<8x784xf32, #tpu.memory_space<vmem>>, vector<8x784xf32>
    %1 = arith.truncf %0 : vector<8x784xf32> to vector<8x784xbf16>
    %c0_1 = arith.constant 0 : index
    %c0_2 = arith.constant 0 : index
    %2 = vector.load %arg2[%c0_1, %c0_2] : memref<784x64xbf16, #tpu.memory_space<vmem>>, vector<784x64xbf16>
    %cst = arith.constant dense<0.000000e+00> : vector<8x64xf32>
    %3 = tpu.matmul %1, %2, %cst {dimension_numbers = #tpu.dot_dimension_numbers<[1], [0], [0], [1], [0, 0, 1, 1], [], []>} : vector<8x784xbf16>, vector<784x64xbf16>, vector<8x64xf32> -> vector<8x64xf32>
    %c0_3 = arith.constant 0 : index
    %c0_4 = arith.constant 0 : index
    %4 = vector.load %arg3[%c0_3, %c0_4] : memref<1x64xf32, #tpu.memory_space<vmem>>, vector<1x64xf32>
    %5 = vector.broadcast %4 : vector<1x64xf32> to vector<8x64xf32>
    %6 = arith.addf %3, %5 : vector<8x64xf32>
    %cst_5 = arith.constant 0.000000e+00 : f32
    %7 = vector.broadcast %cst_5 : f32 to vector<8x64xf32>
    %8 = arith.cmpf ogt, %6, %7 : vector<8x64xf32>
    %cst_6 = arith.constant 0.00999999977 : f32
    %9 = vector.broadcast %cst_6 : f32 to vector<8x64xf32>
    %10 = arith.mulf %9, %6 : vector<8x64xf32>
    %11 = arith.select %8, %6, %10 : vector<8x64xi1>, vector<8x64xf32>
    %12 = arith.truncf %11 : vector<8x64xf32> to vector<8x64xbf16>
    %c0_7 = arith.constant 0 : index
    %c0_8 = arith.constant 0 : index
    %13 = vector.load %arg4[%c0_7, %c0_8] : memref<64x32xbf16, #tpu.memory_space<vmem>>, vector<64x32xbf16>
    %cst_9 = arith.constant dense<0.000000e+00> : vector<8x32xf32>
    %14 = tpu.matmul %12, %13, %cst_9 {dimension_numbers = #tpu.dot_dimension_numbers<[1], [0], [0], [1], [0, 0, 1, 1], [], []>} : vector<8x64xbf16>, vector<64x32xbf16>, vector<8x32xf32> -> vector<8x32xf32>
    %c0_10 = arith.constant 0 : index
    %c0_11 = arith.constant 0 : index
    %15 = vector.load %arg5[%c0_10, %c0_11] : memref<1x32xf32, #tpu.memory_space<vmem>>, vector<1x32xf32>
    %16 = vector.broadcast %15 : vector<1x32xf32> to vector<8x32xf32>
    %17 = arith.addf %14, %16 : vector<8x32xf32>
    %cst_12 = arith.constant 0.000000e+00 : f32
    %18 = vector.broadcast %cst_12 : f32 to vector<8x32xf32>
    %19 = arith.cmpf ogt, %17, %18 : vector<8x32xf32>
    %cst_13 = arith.constant 0.00999999977 : f32
    %20 = vector.broadcast %cst_13 : f32 to vector<8x32xf32>
    %21 = arith.mulf %20, %17 : vector<8x32xf32>
    %22 = arith.select %19, %17, %21 : vector<8x32xi1>, vector<8x32xf32>
    %23 = arith.truncf %22 : vector<8x32xf32> to vector<8x32xbf16>
    %c0_14 = arith.constant 0 : index
    %c0_15 = arith.constant 0 : index
    %24 = vector.load %arg6[%c0_14, %c0_15] : memref<32x16xbf16, #tpu.memory_space<vmem>>, vector<32x16xbf16>
    %cst_16 = arith.constant dense<0.000000e+00> : vector<8x16xf32>
    %25 = tpu.matmul %23, %24, %cst_16 {dimension_numbers = #tpu.dot_dimension_numbers<[1], [0], [0], [1], [0, 0, 1, 1], [], []>} : vector<8x32xbf16>, vector<32x16xbf16>, vector<8x16xf32> -> vector<8x16xf32>
    %c0_17 = arith.constant 0 : index
    %c0_18 = arith.constant 0 : index
    %26 = vector.load %arg7[%c0_17, %c0_18] : memref<1x16xf32, #tpu.memory_space<vmem>>, vector<1x16xf32>
    %27 = vector.broadcast %26 : vector<1x16xf32> to vector<8x16xf32>
    %28 = arith.addf %25, %27 : vector<8x16xf32>
    %cst_19 = arith.constant 0.000000e+00 : f32
    %29 = vector.broadcast %cst_19 : f32 to vector<8x16xf32>
    %30 = arith.cmpf ogt, %28, %29 : vector<8x16xf32>
    %cst_20 = arith.constant 0.00999999977 : f32
    %31 = vector.broadcast %cst_20 : f32 to vector<8x16xf32>
    %32 = arith.mulf %31, %28 : vector<8x16xf32>
    %33 = arith.select %30, %28, %32 : vector<8x16xi1>, vector<8x16xf32>
    %34 = arith.truncf %33 : vector<8x16xf32> to vector<8x16xbf16>
    %c0_21 = arith.constant 0 : index
    %c0_22 = arith.constant 0 : index
    %35 = vector.load %arg8[%c0_21, %c0_22] : memref<16x128xbf16, #tpu.memory_space<vmem>>, vector<16x128xbf16>
    %cst_23 = arith.constant dense<0.000000e+00> : vector<8x128xf32>
    %36 = tpu.matmul %34, %35, %cst_23 {dimension_numbers = #tpu.dot_dimension_numbers<[1], [0], [0], [1], [0, 0, 1, 1], [], []>} : vector<8x16xbf16>, vector<16x128xbf16>, vector<8x128xf32> -> vector<8x128xf32>
    %c0_24 = arith.constant 0 : index
    %c0_25 = arith.constant 0 : index
    %37 = vector.load %arg9[%c0_24, %c0_25] : memref<1x128xf32, #tpu.memory_space<vmem>>, vector<1x128xf32>
    %38 = vector.broadcast %37 : vector<1x128xf32> to vector<8x128xf32>
    %39 = arith.addf %36, %38 : vector<8x128xf32>
    %40 = tpu.iota {dimensions = array<i32: 1>} : vector<8x128xi32>
    %c10_i32 = arith.constant 10 : i32
    %41 = vector.broadcast %c10_i32 : i32 to vector<8x128xi32>
    %42 = arith.cmpi slt, %40, %41 : vector<8x128xi32>
    %cst_26 = arith.constant -1.000000e+30 : f32
    %43 = vector.broadcast %cst_26 : f32 to vector<8x128xf32>
    %44 = arith.select %42, %39, %43 : vector<8x128xi1>, vector<8x128xf32>
    %cst_27 = arith.constant dense<0xFF800000> : vector<8xf32>
    %45 = vector.multi_reduction <maximumf>, %44, %cst_27 [1] : vector<8x128xf32> to vector<8xf32>
    %46 = vector.shape_cast %45 : vector<8xf32> to vector<8x1xf32>
    %47 = vector.broadcast %46 : vector<8x1xf32> to vector<8x128xf32>
    %48 = arith.subf %39, %47 : vector<8x128xf32>
    %49 = math.exp %48 : vector<8x128xf32>
    %cst_28 = arith.constant 0.000000e+00 : f32
    %50 = vector.broadcast %cst_28 : f32 to vector<8x128xf32>
    %51 = arith.select %42, %49, %50 : vector<8x128xi1>, vector<8x128xf32>
    %cst_29 = arith.constant dense<0.000000e+00> : vector<8xf32>
    %52 = vector.multi_reduction <add>, %51, %cst_29 [1] : vector<8x128xf32> to vector<8xf32>
    %53 = vector.shape_cast %52 : vector<8xf32> to vector<8x1xf32>
    %54 = vector.broadcast %53 : vector<8x1xf32> to vector<8x128xf32>
    %55 = arith.divf %51, %54 : vector<8x128xf32>
    %c0_30 = arith.constant 0 : index
    %c0_31 = arith.constant 0 : index
    %56 = vector.load %arg10[%c0_30, %c0_31] : memref<8x128xf32, #tpu.memory_space<vmem>>, vector<8x128xf32>
    tpu.vector_store %arg10[%c0_30, %c0_31], %55 {strides = array<i32>} : memref<8x128xf32, #tpu.memory_space<vmem>>, vector<8x128xf32>,
    return
  }
  func.func @transform_0(%arg0: i32) -> (i32, i32) {
    %c0_i32 = arith.constant 0 : i32
    %c0_i32_0 = arith.constant 0 : i32
    return %arg0, %c0_i32 : i32, i32
  }
  func.func @transform_1(%arg0: i32) -> (i32, i32) {
    %c0_i32 = arith.constant 0 : i32
    %c0_i32_0 = arith.constant 0 : i32
    %c0_i32_1 = arith.constant 0 : i32
    return %c0_i32, %c0_i32_0 : i32, i32
  }
  func.func @transform_2(%arg0: i32) -> (i32, i32) {
    %c0_i32 = arith.constant 0 : i32
    %c0_i32_0 = arith.constant 0 : i32
    %c0_i32_1 = arith.constant 0 : i32
    return %c0_i32, %c0_i32_0 : i32, i32
  }
  func.func @transform_3(%arg0: i32) -> (i32, i32) {
    %c0_i32 = arith.constant 0 : i32
    %c0_i32_0 = arith.constant 0 : i32
    %c0_i32_1 = arith.constant 0 : i32
    return %c0_i32, %c0_i32_0 : i32, i32
  }
  func.func @transform_4(%arg0: i32) -> (i32, i32) {
    %c0_i32 = arith.constant 0 : i32
    %c0_i32_0 = arith.constant 0 : i32
    %c0_i32_1 = arith.constant 0 : i32
    return %c0_i32, %c0_i32_0 : i32, i32
  }
  func.func @transform_5(%arg0: i32) -> (i32, i32) {
    %c0_i32 = arith.constant 0 : i32
    %c0_i32_0 = arith.constant 0 : i32
    %c0_i32_1 = arith.constant 0 : i32
    return %c0_i32, %c0_i32_0 : i32, i32
  }
  func.func @transform_6(%arg0: i32) -> (i32, i32) {
    %c0_i32 = arith.constant 0 : i32
    %c0_i32_0 = arith.constant 0 : i32
    %c0_i32_1 = arith.constant 0 : i32
    return %c0_i32, %c0_i32_0 : i32, i32
  }
  func.func @transform_7(%arg0: i32) -> (i32, i32) {
    %c0_i32 = arith.constant 0 : i32
    %c0_i32_0 = arith.constant 0 : i32
    %c0_i32_1 = arith.constant 0 : i32
    return %c0_i32, %c0_i32_0 : i32, i32
  }
  func.func @transform_8(%arg0: i32) -> (i32, i32) {
    %c0_i32 = arith.constant 0 : i32
    %c0_i32_0 = arith.constant 0 : i32
    %c0_i32_1 = arith.constant 0 : i32
    return %c0_i32, %c0_i32_0 : i32, i32
  }
  func.func @transform_9(%arg0: i32) -> (i32, i32) {
    %c0_i32 = arith.constant 0 : i32
    %c0_i32_0 = arith.constant 0 : i32
    return %arg0, %c0_i32 : i32, i32
  }
}

</mosaic_0001>

<llo_original>
// kernel: tpu_custom_call.1
$region0: #{tpu_custom_call.1}
  #allocation0 [shape = 'u32[]', space=smem, size = 0x4, offset = 0x4, fixed_abs, tag = 'smem constant byte address 0x4 - core index']
  #allocation1 [shape = 'u32[144,128]{1,0:T(1,128)}', space=vmem, size = 0x12000, scoped, tag = 'internal scratch']
  %s0 = inlined_call_operand.vmem [shape: f32[8,784], index: 0, kind: input, shape index: {}]
  %s1 = inlined_call_operand.vmem [shape: bf16[784,64], index: 1, kind: input, shape index: {}]
  %s2 = inlined_call_operand.vmem [shape: f32[1,64], index: 2, kind: input, shape index: {}]
  %s3 = inlined_call_operand.vmem [shape: bf16[64,32], index: 3, kind: input, shape index: {}]
  %s4 = inlined_call_operand.vmem [shape: f32[1,32], index: 4, kind: input, shape index: {}]
  %s5 = inlined_call_operand.vmem [shape: bf16[32,16], index: 5, kind: input, shape index: {}]
  %s6 = inlined_call_operand.vmem [shape: f32[1,16], index: 6, kind: input, shape index: {}]
  %s7 = inlined_call_operand.vmem [shape: bf16[16,128], index: 7, kind: input, shape index: {}]
  %s8 = inlined_call_operand.vmem [shape: f32[1,128], index: 8, kind: input, shape index: {}]
  %s9 = inlined_call_operand.hbm [shape: f32[8,128], index: 9, kind: output, shape index: {}]
  %s10 = sld [smem:[#allocation0]]
  $region46: #{tpu_custom_call.1} parent=0
    _
  %s12 = ssub.s32 1, %s10
  %s13 = scalar_select 0, %s12, %s10
  $region1: #{tpu_custom_call.1} parent=0
    #allocation2 [shape = 'u8[4096]{0}', space=vmem, size = 0x1000, scoped, tag = 'output window, operand 0, single buffered']
    #allocation3 [shape = 's32[1]{0}', space=sflag, size = 0x4, scoped, tag = 'scoped memory for tpu_custom_call.1']
    %14 = vsyncpa [#allocation3], 0
    // Predicated region
    $region2: #{tpu_custom_call.1} parent=1 // pred_check
      _
    $region3: #{tpu_custom_call.1} parent=1 // pred_check_branch
      %16 = sbr.rel (0) target = $region5
    $region4: #{tpu_custom_call.1} parent=1 // pred_region
      _
    $region5: #{tpu_custom_call.1} parent=1 // pred_fallthru
      _
    // Predicated region
    $region6: #{tpu_custom_call.1} parent=1 // pred_check
      _
    $region7: #{tpu_custom_call.1} parent=1 // pred_check_branch
      %18 = sbr.rel (0) target = $region9
    $region8: #{tpu_custom_call.1} parent=1 // pred_region
      _
    $region9: #{tpu_custom_call.1} parent=1 // pred_fallthru
      _
    // Predicated region
    $region10: #{tpu_custom_call.1} parent=1 // pred_check
      _
    $region11: #{tpu_custom_call.1} parent=1 // pred_check_branch
      %20 = sbr.rel (0) target = $region13
    $region12: #{tpu_custom_call.1} parent=1 // pred_region
      _
    $region13: #{tpu_custom_call.1} parent=1 // pred_fallthru
      _
    // Predicated region
    $region14: #{tpu_custom_call.1} parent=1 // pred_check
      _
    $region15: #{tpu_custom_call.1} parent=1 // pred_check_branch
      %22 = sbr.rel (0) target = $region17
    $region16: #{tpu_custom_call.1} parent=1 // pred_region
      _
    $region17: #{tpu_custom_call.1} parent=1 // pred_fallthru
      _
    // Predicated region
    $region18: #{tpu_custom_call.1} parent=1 // pred_check
      _
    $region19: #{tpu_custom_call.1} parent=1 // pred_check_branch
      %24 = sbr.rel (0) target = $region21
    $region20: #{tpu_custom_call.1} parent=1 // pred_region
      _
    $region21: #{tpu_custom_call.1} parent=1 // pred_fallthru
      _
    // Predicated region
    $region22: #{tpu_custom_call.1} parent=1 // pred_check
      _
    $region23: #{tpu_custom_call.1} parent=1 // pred_check_branch
      %26 = sbr.rel (0) target = $region25
    $region24: #{tpu_custom_call.1} parent=1 // pred_region
      _
    $region25: #{tpu_custom_call.1} parent=1 // pred_fallthru
      _
    // Predicated region
    $region26: #{tpu_custom_call.1} parent=1 // pred_check
      _
    $region27: #{tpu_custom_call.1} parent=1 // pred_check_branch
      %28 = sbr.rel (0) target = $region29
    $region28: #{tpu_custom_call.1} parent=1 // pred_region
      _
    $region29: #{tpu_custom_call.1} parent=1 // pred_fallthru
      _
    // Predicated region
    $region30: #{tpu_custom_call.1} parent=1 // pred_check
      _
    $region31: #{tpu_custom_call.1} parent=1 // pred_check_branch
      %30 = sbr.rel (0) target = $region33
    $region32: #{tpu_custom_call.1} parent=1 // pred_region
      _
    $region33: #{tpu_custom_call.1} parent=1 // pred_fallthru
      _
    // Predicated region
    $region34: #{tpu_custom_call.1} parent=1 // pred_check
      _
    $region35: #{tpu_custom_call.1} parent=1 // pred_check_branch
      %32 = sbr.rel (0) target = $region37
    $region36: #{tpu_custom_call.1} parent=1 // pred_region
      _
    $region37: #{tpu_custom_call.1} parent=1 // pred_fallthru
      _
    %v34 = vld [vmem:[%s0] sm:$0xff]
    %v35 = vld [vmem:[%s0 + $0x8] sm:$0xff]
    %v36 = vld [vmem:[%s0 + $0x10] sm:$0xff]
    %v37 = vld [vmem:[%s0 + $0x18] sm:$0xff]
    %v38 = vld [vmem:[%s0 + $0x20] sm:$0xff]
    %v39 = vld [vmem:[%s0 + $0x28] sm:$0xff]
    %v40 = vld [vmem:[%s0 + $0x30] sm:$0xff]
    %v41 = vpack.c.bf16 %v34, %v34
    %v42 = vpack.c.bf16 %v35, %v35
    %v43 = vpack.c.bf16 %v36, %v36
    %v44 = vpack.c.bf16 %v37, %v37
    %v45 = vpack.c.bf16 %v38, %v38
    %v46 = vpack.c.bf16 %v39, %v39
    %v47 = vpack.c.bf16 %v40, %v40
    %v48 = vld [vmem:[%s1] sm:$0xf]
    %v49 = vld [vmem:[%s1 + $0x4] sm:$0xf]
    %v50 = vld [vmem:[%s1 + $0x8] sm:$0xf]
    %v51 = vld [vmem:[%s1 + $0xc] sm:$0xf]
    %v52 = vld [vmem:[%s1 + $0x10] sm:$0xf]
    %v53 = vld [vmem:[%s1 + $0x14] sm:$0xf]
    %v54 = vld [vmem:[%s1 + $0x18] sm:$0xf]
    %v55 = vld [vmem:[%s1 + $0x1c] sm:$0xf]
    %v56 = vld [vmem:[%s1 + $0x20] sm:$0xf]
    %v57 = vld [vmem:[%s1 + $0x24] sm:$0xf]
    %v58 = vld [vmem:[%s1 + $0x28] sm:$0xf]
    %v59 = vld [vmem:[%s1 + $0x2c] sm:$0xf]
    %v60 = vld [vmem:[%s1 + $0x30] sm:$0xf]
    %v61 = vld [vmem:[%s1 + $0x34] sm:$0xf]
    %v62 = vld [vmem:[%s1 + $0x38] sm:$0xf]
    %v63 = vld [vmem:[%s1 + $0x3c] sm:$0xf]
    %v64 = vld [vmem:[%s1 + $0x40] sm:$0xf]
    %v65 = vld [vmem:[%s1 + $0x44] sm:$0xf]
    %v66 = vld [vmem:[%s1 + $0x48] sm:$0xf]
    %v67 = vld [vmem:[%s1 + $0x4c] sm:$0xf]
    %v68 = vld [vmem:[%s1 + $0x50] sm:$0xf]
    %v69 = vld [vmem:[%s1 + $0x54] sm:$0xf]
    %v70 = vld [vmem:[%s1 + $0x58] sm:$0xf]
    %v71 = vld [vmem:[%s1 + $0x5c] sm:$0xf]
    %v72 = vld [vmem:[%s1 + $0x60] sm:$0xf]
    %v73 = vld [vmem:[%s1 + $0x64] sm:$0xf]
    %v74 = vld [vmem:[%s1 + $0x68] sm:$0xf]
    %v75 = vld [vmem:[%s1 + $0x6c] sm:$0xf]
    %v76 = vld [vmem:[%s1 + $0x70] sm:$0xf]
    %v77 = vld [vmem:[%s1 + $0x74] sm:$0xf]
    %v78 = vld [vmem:[%s1 + $0x78] sm:$0xf]
    %v79 = vld [vmem:[%s1 + $0x7c] sm:$0xf]
    %v80 = vld [vmem:[%s1 + $0x80] sm:$0xf]
    %v81 = vld [vmem:[%s1 + $0x84] sm:$0xf]
    %v82 = vld [vmem:[%s1 + $0x88] sm:$0xf]
    %v83 = vld [vmem:[%s1 + $0x8c] sm:$0xf]
    %v84 = vld [vmem:[%s1 + $0x90] sm:$0xf]
    %v85 = vld [vmem:[%s1 + $0x94] sm:$0xf]
    %v86 = vld [vmem:[%s1 + $0x98] sm:$0xf]
    %v87 = vld [vmem:[%s1 + $0x9c] sm:$0xf]
    %v88 = vld [vmem:[%s1 + $0xa0] sm:$0xf]
    %v89 = vld [vmem:[%s1 + $0xa4] sm:$0xf]
    %v90 = vld [vmem:[%s1 + $0xa8] sm:$0xf]
    %v91 = vld [vmem:[%s1 + $0xac] sm:$0xf]
    %v92 = vld [vmem:[%s1 + $0xb0] sm:$0xf]
    %v93 = vld [vmem:[%s1 + $0xb4] sm:$0xf]
    %v94 = vld [vmem:[%s1 + $0xb8] sm:$0xf]
    %v95 = vld [vmem:[%s1 + $0xbc] sm:$0xf]
    %v96 = vld [vmem:[%s1 + $0xc0] sm:$0xf]
    %v97 = vld [vmem:[%s1 + $0xc4] sm:$0xf]
    %v98 = vld [vmem:[%s1 + $0xc8] sm:$0xf]
    %v99 = vld [vmem:[%s1 + $0xcc] sm:$0xf]
    %v100 = vld [vmem:[%s1 + $0xd0] sm:$0xf]
    %v101 = vld [vmem:[%s1 + $0xd4] sm:$0xf]
    %v102 = vld [vmem:[%s1 + $0xd8] sm:$0xf]
    %v103 = vld [vmem:[%s1 + $0xdc] sm:$0xf]
    %v104 = vld [vmem:[%s1 + $0xe0] sm:$0xf]
    %v105 = vld [vmem:[%s1 + $0xe4] sm:$0xf]
    %v106 = vld [vmem:[%s1 + $0xe8] sm:$0xf]
    %v107 = vld [vmem:[%s1 + $0xec] sm:$0xf]
    %v108 = vld [vmem:[%s1 + $0xf0] sm:$0xf]
    %v109 = vld [vmem:[%s1 + $0xf4] sm:$0xf]
    %v110 = vld [vmem:[%s1 + $0xf8] sm:$0xf]
    %v111 = vld [vmem:[%s1 + $0xfc] sm:$0xf]
    %v112 = vld [vmem:[%s1 + $0x100] sm:$0xf]
    %v113 = vld [vmem:[%s1 + $0x104] sm:$0xf]
    %v114 = vld [vmem:[%s1 + $0x108] sm:$0xf]
    %v115 = vld [vmem:[%s1 + $0x10c] sm:$0xf]
    %v116 = vld [vmem:[%s1 + $0x110] sm:$0xf]
    %v117 = vld [vmem:[%s1 + $0x114] sm:$0xf]
    %v118 = vld [vmem:[%s1 + $0x118] sm:$0xf]
    %v119 = vld [vmem:[%s1 + $0x11c] sm:$0xf]
    %v120 = vld [vmem:[%s1 + $0x120] sm:$0xf]
    %v121 = vld [vmem:[%s1 + $0x124] sm:$0xf]
    %v122 = vld [vmem:[%s1 + $0x128] sm:$0xf]
    %v123 = vld [vmem:[%s1 + $0x12c] sm:$0xf]
    %v124 = vld [vmem:[%s1 + $0x130] sm:$0xf]
    %v125 = vld [vmem:[%s1 + $0x134] sm:$0xf]
    %v126 = vld [vmem:[%s1 + $0x138] sm:$0xf]
    %v127 = vld [vmem:[%s1 + $0x13c] sm:$0xf]
    %v128 = vld [vmem:[%s1 + $0x140] sm:$0xf]
    %v129 = vld [vmem:[%s1 + $0x144] sm:$0xf]
    %v130 = vld [vmem:[%s1 + $0x148] sm:$0xf]
    %v131 = vld [vmem:[%s1 + $0x14c] sm:$0xf]
    %v132 = vld [vmem:[%s1 + $0x150] sm:$0xf]
    %v133 = vld [vmem:[%s1 + $0x154] sm:$0xf]
    %v134 = vld [vmem:[%s1 + $0x158] sm:$0xf]
    %v135 = vld [vmem:[%s1 + $0x15c] sm:$0xf]
    %v136 = vld [vmem:[%s1 + $0x160] sm:$0xf]
    %v137 = vld [vmem:[%s1 + $0x164] sm:$0xf]
    %v138 = vld [vmem:[%s1 + $0x168] sm:$0xf]
    %v139 = vld [vmem:[%s1 + $0x16c] sm:$0xf]
    %v140 = vld [vmem:[%s1 + $0x170] sm:$0xf]
    %v141 = vld [vmem:[%s1 + $0x174] sm:$0xf]
    %v142 = vld [vmem:[%s1 + $0x178] sm:$0xf]
    %v143 = vld [vmem:[%s1 + $0x17c] sm:$0xf]
    %v144 = vld [vmem:[%s1 + $0x180] sm:$0xf]
    %v145 = vld [vmem:[%s1 + $0x184] sm:$0xf]
    %v146 = vld [vmem:[%s2] sm:$0x1]
    %v148 = vlaneseq
    %v149 = vshrl.u32 %v148, 7
    %v150 = vsub.s32 0, %v149
    %v151 = vrot.slane %v146, %v150
    %v251 = vunpack.c.l.b16 %v48
    %v252 = vunpack.c.l.b16 %v49
    %v253 = vunpack.c.l.b16 %v50
    %v254 = vunpack.c.l.b16 %v51
    %v255 = vunpack.c.l.b16 %v52
    %v256 = vunpack.c.l.b16 %v53
    %v257 = vunpack.c.l.b16 %v54
    %v258 = vunpack.c.l.b16 %v55
    %v259 = vunpack.c.l.b16 %v56
    %v260 = vunpack.c.l.b16 %v57
    %v261 = vunpack.c.l.b16 %v58
    %v262 = vunpack.c.l.b16 %v59
    %v263 = vunpack.c.l.b16 %v60
    %v264 = vunpack.c.l.b16 %v61
    %v265 = vunpack.c.l.b16 %v62
    %v266 = vunpack.c.l.b16 %v63
    %v267 = vunpack.c.l.b16 %v64
    %v268 = vunpack.c.l.b16 %v65
    %v269 = vunpack.c.l.b16 %v66
    %v270 = vunpack.c.l.b16 %v67
    %v271 = vunpack.c.l.b16 %v68
    %v272 = vunpack.c.l.b16 %v69
    %v273 = vunpack.c.l.b16 %v70
    %v274 = vunpack.c.l.b16 %v71
    %v275 = vunpack.c.l.b16 %v72
    %v276 = vunpack.c.l.b16 %v73
    %v277 = vunpack.c.l.b16 %v74
    %v278 = vunpack.c.l.b16 %v75
    %v279 = vunpack.c.l.b16 %v76
    %v280 = vunpack.c.l.b16 %v77
    %v281 = vunpack.c.l.b16 %v78
    %v282 = vunpack.c.l.b16 %v79
    %v283 = vunpack.c.l.b16 %v80
    %v284 = vunpack.c.l.b16 %v81
    %v285 = vunpack.c.l.b16 %v82
    %v286 = vunpack.c.l.b16 %v83
    %v287 = vunpack.c.l.b16 %v84
    %v288 = vunpack.c.l.b16 %v85
    %v289 = vunpack.c.l.b16 %v86
    %v290 = vunpack.c.l.b16 %v87
    %v291 = vunpack.c.l.b16 %v88
    %v292 = vunpack.c.l.b16 %v89
    %v293 = vunpack.c.l.b16 %v90
    %v294 = vunpack.c.l.b16 %v91
    %v295 = vunpack.c.l.b16 %v92
    %v296 = vunpack.c.l.b16 %v93
    %v297 = vunpack.c.l.b16 %v94
    %v298 = vunpack.c.l.b16 %v95
    %v299 = vunpack.c.l.b16 %v96
    %v300 = vunpack.c.l.b16 %v97
    %v301 = vunpack.c.l.b16 %v98
    %v302 = vunpack.c.l.b16 %v99
    %v303 = vunpack.c.l.b16 %v100
    %v304 = vunpack.c.l.b16 %v101
    %v305 = vunpack.c.l.b16 %v102
    %v306 = vunpack.c.l.b16 %v103
    %v307 = vunpack.c.l.b16 %v104
    %v308 = vunpack.c.l.b16 %v105
    %v309 = vunpack.c.l.b16 %v106
    %v310 = vunpack.c.l.b16 %v107
    %v311 = vunpack.c.l.b16 %v108
    %v312 = vunpack.c.l.b16 %v109
    %v313 = vunpack.c.l.b16 %v110
    %v314 = vunpack.c.l.b16 %v111
    %v315 = vunpack.c.l.b16 %v112
    %v316 = vunpack.c.l.b16 %v113
    %v317 = vunpack.c.l.b16 %v114
    %v318 = vunpack.c.l.b16 %v115
    %v319 = vunpack.c.l.b16 %v116
    %v320 = vunpack.c.l.b16 %v117
    %v321 = vunpack.c.l.b16 %v118
    %v322 = vunpack.c.l.b16 %v119
    %v323 = vunpack.c.l.b16 %v120
    %v324 = vunpack.c.l.b16 %v121
    %v325 = vunpack.c.l.b16 %v122
    %v326 = vunpack.c.l.b16 %v123
    %v327 = vunpack.c.l.b16 %v124
    %v328 = vunpack.c.l.b16 %v125
    %v329 = vunpack.c.l.b16 %v126
    %v330 = vunpack.c.l.b16 %v127
    %v331 = vunpack.c.l.b16 %v128
    %v332 = vunpack.c.l.b16 %v129
    %v333 = vunpack.c.l.b16 %v130
    %v334 = vunpack.c.l.b16 %v131
    %v335 = vunpack.c.l.b16 %v132
    %v336 = vunpack.c.l.b16 %v133
    %v337 = vunpack.c.l.b16 %v134
    %v338 = vunpack.c.l.b16 %v135
    %v339 = vunpack.c.l.b16 %v136
    %v340 = vunpack.c.l.b16 %v137
    %v341 = vunpack.c.l.b16 %v138
    %v342 = vunpack.c.l.b16 %v139
    %v343 = vunpack.c.l.b16 %v140
    %v344 = vunpack.c.l.b16 %v141
    %v345 = vunpack.c.l.b16 %v142
    %v346 = vunpack.c.l.b16 %v143
    %v347 = vunpack.c.l.b16 %v144
    %v348 = vunpack.c.l.b16 %v145
    %v349 = vpack.c.b16 %v252, %v251
    %v350 = vpack.c.b16 %v254, %v253
    %v351 = vpack.c.b16 %v256, %v255
    %v352 = vpack.c.b16 %v258, %v257
    %v353 = vpack.c.b16 %v260, %v259
    %v354 = vpack.c.b16 %v262, %v261
    %v355 = vpack.c.b16 %v264, %v263
    %v356 = vpack.c.b16 %v266, %v265
    %v357 = vpack.c.b16 %v268, %v267
    %v358 = vpack.c.b16 %v270, %v269
    %v359 = vpack.c.b16 %v272, %v271
    %v360 = vpack.c.b16 %v274, %v273
    %v361 = vpack.c.b16 %v276, %v275
    %v362 = vpack.c.b16 %v278, %v277
    %v363 = vpack.c.b16 %v280, %v279
    %v364 = vpack.c.b16 %v282, %v281
    %v365 = vpack.c.b16 %v284, %v283
    %v366 = vpack.c.b16 %v286, %v285
    %v367 = vpack.c.b16 %v288, %v287
    %v368 = vpack.c.b16 %v290, %v289
    %v369 = vpack.c.b16 %v292, %v291
    %v370 = vpack.c.b16 %v294, %v293
    %v371 = vpack.c.b16 %v296, %v295
    %v372 = vpack.c.b16 %v298, %v297
    %v373 = vpack.c.b16 %v300, %v299
    %v374 = vpack.c.b16 %v302, %v301
    %v375 = vpack.c.b16 %v304, %v303
    %v376 = vpack.c.b16 %v306, %v305
    %v377 = vpack.c.b16 %v308, %v307
    %v378 = vpack.c.b16 %v310, %v309
    %v379 = vpack.c.b16 %v312, %v311
    %v380 = vpack.c.b16 %v314, %v313
    %v381 = vpack.c.b16 %v316, %v315
    %v382 = vpack.c.b16 %v318, %v317
    %v383 = vpack.c.b16 %v320, %v319
    %v384 = vpack.c.b16 %v322, %v321
    %v385 = vpack.c.b16 %v324, %v323
    %v386 = vpack.c.b16 %v326, %v325
    %v387 = vpack.c.b16 %v328, %v327
    %v388 = vpack.c.b16 %v330, %v329
    %v389 = vpack.c.b16 %v332, %v331
    %v390 = vpack.c.b16 %v334, %v333
    %v391 = vpack.c.b16 %v336, %v335
    %v392 = vpack.c.b16 %v338, %v337
    %v393 = vpack.c.b16 %v340, %v339
    %v394 = vpack.c.b16 %v342, %v341
    %v395 = vpack.c.b16 %v344, %v343
    %v396 = vpack.c.b16 %v346, %v345
    %v397 = vpack.c.b16 %v348, %v347
    %vm447 = vcmask 130048
    %v449 = vsel %vm447, %v47, 0
    %451 = vmatprep.subr.bf16.mxu0 0
    %452 = vmatpush1.bf16.msra.mxu0 %v349
    %453 = vmatprep.subr.bf16.mxu0 0
    %454 = vmatpush1.bf16.msra.mxu0 %v350
    %455 = vmatprep.subr.bf16.mxu0 0
    %456 = vmatpush1.bf16.msra.mxu0 %v351
    %457 = vmatprep.subr.bf16.mxu0 0
    %458 = vmatpush1.bf16.msra.mxu0 %v352
    %459 = vmatprep.subr.bf16.mxu0 0
    %460 = vmatpush1.bf16.msra.mxu0 %v353
    %461 = vmatprep.subr.bf16.mxu0 0
    %462 = vmatpush1.bf16.msra.mxu0 %v354
    %463 = vmatprep.subr.bf16.mxu0 0
    %464 = vmatpush1.bf16.msra.mxu0 %v355
    %465 = vmatprep.subr.bf16.mxu0 0
    %466 = vmatpush1.bf16.msra.mxu0 %v356
    %467 = vmatprep.subr.bf16.mxu0 0
    %468 = vmatpush1.bf16.msra.mxu0 %v357
    %469 = vmatprep.subr.bf16.mxu0 0
    %470 = vmatpush1.bf16.msra.mxu0 %v358
    %471 = vmatprep.subr.bf16.mxu0 0
    %472 = vmatpush1.bf16.msra.mxu0 %v359
    %473 = vmatprep.subr.bf16.mxu0 0
    %474 = vmatpush1.bf16.msra.mxu0 %v360
    %475 = vmatprep.subr.bf16.mxu0 0
    %476 = vmatpush1.bf16.msra.mxu0 %v361
    %477 = vmatprep.subr.bf16.mxu0 0
    %478 = vmatpush1.bf16.msra.mxu0 %v362
    %479 = vmatprep.subr.bf16.mxu0 0
    %480 = vmatpush1.bf16.msra.mxu0 %v363
    %481 = vmatprep.subr.bf16.mxu0 0
    %482 = vmatpush1.bf16.msra.mxu0 %v364
    %483 = vmatprep.mubr.bf16.mxu0 %v42
    %484 = vmatmul.mubr.bf16.gmra.mrb[0].mxu0 %v41
    %v485 = vpop.f32.mrb[0].mxu0
    %v486 = vadd.f32 %v151, %v485
    %v487 = vpop.f32.mrb[0].mxu0
    %v488 = vpop.f32.mrb[0].mxu0
    %v489 = vpop.f32.mrb[0].mxu0
    %490 = vdwg.mxu0
    %491 = vmatprep.subr.bf16.mxu0 0
    %492 = vmatpush1.bf16.msra.mxu0 %v365
    %493 = vmatprep.subr.bf16.mxu0 0
    %494 = vmatpush1.bf16.msra.mxu0 %v366
    %495 = vmatprep.subr.bf16.mxu0 0
    %496 = vmatpush1.bf16.msra.mxu0 %v367
    %497 = vmatprep.subr.bf16.mxu0 0
    %498 = vmatpush1.bf16.msra.mxu0 %v368
    %499 = vmatprep.subr.bf16.mxu0 0
    %500 = vmatpush1.bf16.msra.mxu0 %v369
    %501 = vmatprep.subr.bf16.mxu0 0
    %502 = vmatpush1.bf16.msra.mxu0 %v370
    %503 = vmatprep.subr.bf16.mxu0 0
    %504 = vmatpush1.bf16.msra.mxu0 %v371
    %505 = vmatprep.subr.bf16.mxu0 0
    %506 = vmatpush1.bf16.msra.mxu0 %v372
    %507 = vmatprep.subr.bf16.mxu0 0
    %508 = vmatpush1.bf16.msra.mxu0 %v373
    %509 = vmatprep.subr.bf16.mxu0 0
    %510 = vmatpush1.bf16.msra.mxu0 %v374
    %511 = vmatprep.subr.bf16.mxu0 0
    %512 = vmatpush1.bf16.msra.mxu0 %v375
    %513 = vmatprep.subr.bf16.mxu0 0
    %514 = vmatpush1.bf16.msra.mxu0 %v376
    %515 = vmatprep.subr.bf16.mxu0 0
    %516 = vmatpush1.bf16.msra.mxu0 %v377
    %517 = vmatprep.subr.bf16.mxu0 0
    %518 = vmatpush1.bf16.msra.mxu0 %v378
    %519 = vmatprep.subr.bf16.mxu0 0
    %520 = vmatpush1.bf16.msra.mxu0 %v379
    %521 = vmatprep.subr.bf16.mxu0 0
    %522 = vmatpush1.bf16.msra.mxu0 %v380
    %523 = vmatprep.mubr.bf16.mxu0 %v44
    %524 = vmatmul.mubr.bf16.gmra.mrb[0].mxu0 %v43
    %v525 = vpop.f32.mrb[0].mxu0
    %v526 = vadd.f32 %v486, %v525
    %v527 = vpop.f32.mrb[0].mxu0
    %v528 = vpop.f32.mrb[0].mxu0
    %v529 = vpop.f32.mrb[0].mxu0
    %530 = vdwg.mxu0
    %531 = vmatprep.subr.bf16.mxu0 0
    %532 = vmatpush1.bf16.msra.mxu0 %v381
    %533 = vmatprep.subr.bf16.mxu0 0
    %534 = vmatpush1.bf16.msra.mxu0 %v382
    %535 = vmatprep.subr.bf16.mxu0 0
    %536 = vmatpush1.bf16.msra.mxu0 %v383
    %537 = vmatprep.subr.bf16.mxu0 0
    %538 = vmatpush1.bf16.msra.mxu0 %v384
    %539 = vmatprep.subr.bf16.mxu0 0
    %540 = vmatpush1.bf16.msra.mxu0 %v385
    %541 = vmatprep.subr.bf16.mxu0 0
    %542 = vmatpush1.bf16.msra.mxu0 %v386
    %543 = vmatprep.subr.bf16.mxu0 0
    %544 = vmatpush1.bf16.msra.mxu0 %v387
    %545 = vmatprep.subr.bf16.mxu0 0
    %546 = vmatpush1.bf16.msra.mxu0 %v388
    %547 = vmatprep.subr.bf16.mxu0 0
    %548 = vmatpush1.bf16.msra.mxu0 %v389
    %549 = vmatprep.subr.bf16.mxu0 0
    %550 = vmatpush1.bf16.msra.mxu0 %v390
    %551 = vmatprep.subr.bf16.mxu0 0
    %552 = vmatpush1.bf16.msra.mxu0 %v391
    %553 = vmatprep.subr.bf16.mxu0 0
    %554 = vmatpush1.bf16.msra.mxu0 %v392
    %555 = vmatprep.subr.bf16.mxu0 0
    %556 = vmatpush1.bf16.msra.mxu0 %v393
    %557 = vmatprep.subr.bf16.mxu0 0
    %558 = vmatpush1.bf16.msra.mxu0 %v394
    %559 = vmatprep.subr.bf16.mxu0 0
    %560 = vmatpush1.bf16.msra.mxu0 %v395
    %561 = vmatprep.subr.bf16.mxu0 0
    %562 = vmatpush1.bf16.msra.mxu0 %v396
    %563 = vmatprep.mubr.bf16.mxu0 %v46
    %564 = vmatmul.mubr.bf16.gmra.mrb[0].mxu0 %v45
    %v565 = vpop.f32.mrb[0].mxu0
    %v566 = vadd.f32 %v526, %v565
    %v567 = vpop.f32.mrb[0].mxu0
    %v568 = vpop.f32.mrb[0].mxu0
    %v569 = vpop.f32.mrb[0].mxu0
    %570 = vdwg.mxu0
    %571 = vmatprep.subr.bf16.mxu0 0
    %572 = vmatpush1.bf16.msra.mxu0 %v397
    %573 = vmatprep.subr.bf16.mxu0 0
    %574 = vmatpush1.bf16.msra.mxu0 0
    %575 = vmatprep.subr.bf16.mxu0 0
    %576 = vmatpush1.bf16.msra.mxu0 0
    %577 = vmatprep.subr.bf16.mxu0 0
    %578 = vmatpush1.bf16.msra.mxu0 0
    %579 = vmatprep.subr.bf16.mxu0 0
    %580 = vmatpush1.bf16.msra.mxu0 0
    %581 = vmatprep.subr.bf16.mxu0 0
    %582 = vmatpush1.bf16.msra.mxu0 0
    %583 = vmatprep.subr.bf16.mxu0 0
    %584 = vmatpush1.bf16.msra.mxu0 0
    %585 = vmatprep.subr.bf16.mxu0 0
    %586 = vmatpush1.bf16.msra.mxu0 0
    %587 = vmatprep.subr.bf16.mxu0 0
    %588 = vmatpush1.bf16.msra.mxu0 0
    %589 = vmatprep.subr.bf16.mxu0 0
    %590 = vmatpush1.bf16.msra.mxu0 0
    %591 = vmatprep.subr.bf16.mxu0 0
    %592 = vmatpush1.bf16.msra.mxu0 0
    %593 = vmatprep.subr.bf16.mxu0 0
    %594 = vmatpush1.bf16.msra.mxu0 0
    %595 = vmatprep.subr.bf16.mxu0 0
    %596 = vmatpush1.bf16.msra.mxu0 0
    %597 = vmatprep.subr.bf16.mxu0 0
    %598 = vmatpush1.bf16.msra.mxu0 0
    %599 = vmatprep.subr.bf16.mxu0 0
    %600 = vmatpush1.bf16.msra.mxu0 0
    %601 = vmatprep.subr.bf16.mxu0 0
    %602 = vmatpush1.bf16.msra.mxu0 0
    %603 = vmatprep.mubr.bf16.mxu0 0
    %604 = vmatmul.mubr.bf16.gmra.mrb[0].mxu0 %v449
    %v605 = vpop.f32.mrb[0].mxu0
    %v606 = vadd.f32 %v566, %v605
    %v607 = vpop.f32.mrb[0].mxu0
    %v608 = vpop.f32.mrb[0].mxu0
    %v609 = vpop.f32.mrb[0].mxu0
    %610 = vdwg.mxu0
    %vm611 = vcmp.gt.f32.partialorder %v606, 0.0
    %v612 = vmul.f32 %v606, 0.01
    %v613 = vsel %vm611, %v606, %v612
    %v614 = vpack.c.bf16 %v613, %v613
    %v615 = vld [vmem:[%s3] sm:$0xf]
    %v616 = vld [vmem:[%s3 + $0x4] sm:$0xf]
    %v617 = vld [vmem:[%s3 + $0x8] sm:$0xf]
    %v618 = vld [vmem:[%s3 + $0xc] sm:$0xf]
    %v619 = vld [vmem:[%s3 + $0x10] sm:$0xf]
    %v620 = vld [vmem:[%s3 + $0x14] sm:$0xf]
    %v621 = vld [vmem:[%s3 + $0x18] sm:$0xf]
    %v622 = vld [vmem:[%s3 + $0x1c] sm:$0xf]
    %v623 = vld [vmem:[%s4] sm:$0x1]
    %v625 = vlaneseq
    %v626 = vshrl.u32 %v625, 7
    %v627 = vsub.s32 0, %v626
    %v628 = vrot.slane %v623, %v627
    %v638 = vunpack.c.l.b16 %v615
    %v639 = vunpack.c.l.b16 %v616
    %v640 = vunpack.c.l.b16 %v617
    %v641 = vunpack.c.l.b16 %v618
    %v642 = vunpack.c.l.b16 %v619
    %v643 = vunpack.c.l.b16 %v620
    %v644 = vunpack.c.l.b16 %v621
    %v645 = vunpack.c.l.b16 %v622
    %v646 = vpack.c.b16 %v639, %v638
    %v647 = vpack.c.b16 %v641, %v640
    %v648 = vpack.c.b16 %v643, %v642
    %v649 = vpack.c.b16 %v645, %v644
    %vm654 = vcmask 523264
    %v656 = vsel %vm654, %v614, 0
    %658 = vmatprep.subr.bf16.mxu0 0
    %659 = vmatpush1.bf16.msra.mxu0 %v646
    %660 = vmatprep.subr.bf16.mxu0 0
    %661 = vmatpush1.bf16.msra.mxu0 %v647
    %662 = vmatprep.subr.bf16.mxu0 0
    %663 = vmatpush1.bf16.msra.mxu0 %v648
    %664 = vmatprep.subr.bf16.mxu0 0
    %665 = vmatpush1.bf16.msra.mxu0 %v649
    %666 = vmatprep.subr.bf16.mxu0 0
    %667 = vmatpush1.bf16.msra.mxu0 0
    %668 = vmatprep.subr.bf16.mxu0 0
    %669 = vmatpush1.bf16.msra.mxu0 0
    %670 = vmatprep.subr.bf16.mxu0 0
    %671 = vmatpush1.bf16.msra.mxu0 0
    %672 = vmatprep.subr.bf16.mxu0 0
    %673 = vmatpush1.bf16.msra.mxu0 0
    %674 = vmatprep.subr.bf16.mxu0 0
    %675 = vmatpush1.bf16.msra.mxu0 0
    %676 = vmatprep.subr.bf16.mxu0 0
    %677 = vmatpush1.bf16.msra.mxu0 0
    %678 = vmatprep.subr.bf16.mxu0 0
    %679 = vmatpush1.bf16.msra.mxu0 0
    %680 = vmatprep.subr.bf16.mxu0 0
    %681 = vmatpush1.bf16.msra.mxu0 0
    %682 = vmatprep.subr.bf16.mxu0 0
    %683 = vmatpush1.bf16.msra.mxu0 0
    %684 = vmatprep.subr.bf16.mxu0 0
    %685 = vmatpush1.bf16.msra.mxu0 0
    %686 = vmatprep.subr.bf16.mxu0 0
    %687 = vmatpush1.bf16.msra.mxu0 0
    %688 = vmatprep.subr.bf16.mxu0 0
    %689 = vmatpush1.bf16.msra.mxu0 0
    %690 = vmatprep.mubr.bf16.mxu0 0
    %691 = vmatmul.mubr.bf16.gmra.mrb[0].mxu0 %v656
    %v692 = vpop.f32.mrb[0].mxu0
    %v693 = vadd.f32 %v628, %v692
    %v694 = vpop.f32.mrb[0].mxu0
    %v695 = vpop.f32.mrb[0].mxu0
    %v696 = vpop.f32.mrb[0].mxu0
    %697 = vdwg.mxu0
    %vm698 = vcmp.gt.f32.partialorder %v693, 0.0
    %v699 = vmul.f32 %v693, 0.01
    %v700 = vsel %vm698, %v693, %v699
    %v701 = vpack.c.bf16 %v700, %v700
    %v702 = vld [vmem:[%s5] sm:$0xf]
    %v703 = vld [vmem:[%s5 + $0x4] sm:$0xf]
    %v704 = vld [vmem:[%s5 + $0x8] sm:$0xf]
    %v705 = vld [vmem:[%s5 + $0xc] sm:$0xf]
    %v706 = vld [vmem:[%s6] sm:$0x1]
    %v708 = vlaneseq
    %v709 = vshrl.u32 %v708, 7
    %v710 = vsub.s32 0, %v709
    %v711 = vrot.slane %v706, %v710
    %v717 = vunpack.c.l.b16 %v702
    %v718 = vunpack.c.l.b16 %v703
    %v719 = vunpack.c.l.b16 %v704
    %v720 = vunpack.c.l.b16 %v705
    %v721 = vpack.c.b16 %v718, %v717
    %v722 = vpack.c.b16 %v720, %v719
    %vm725 = vcmask 261120
    %v727 = vsel %vm725, %v701, 0
    %729 = vmatprep.subr.bf16.mxu0 0
    %730 = vmatpush1.bf16.msra.mxu0 %v721
    %731 = vmatprep.subr.bf16.mxu0 0
    %732 = vmatpush1.bf16.msra.mxu0 %v722
    %733 = vmatprep.subr.bf16.mxu0 0
    %734 = vmatpush1.bf16.msra.mxu0 0
    %735 = vmatprep.subr.bf16.mxu0 0
    %736 = vmatpush1.bf16.msra.mxu0 0
    %737 = vmatprep.subr.bf16.mxu0 0
    %738 = vmatpush1.bf16.msra.mxu0 0
    %739 = vmatprep.subr.bf16.mxu0 0
    %740 = vmatpush1.bf16.msra.mxu0 0
    %741 = vmatprep.subr.bf16.mxu0 0
    %742 = vmatpush1.bf16.msra.mxu0 0
    %743 = vmatprep.subr.bf16.mxu0 0
    %744 = vmatpush1.bf16.msra.mxu0 0
    %745 = vmatprep.subr.bf16.mxu0 0
    %746 = vmatpush1.bf16.msra.mxu0 0
    %747 = vmatprep.subr.bf16.mxu0 0
    %748 = vmatpush1.bf16.msra.mxu0 0
    %749 = vmatprep.subr.bf16.mxu0 0
    %750 = vmatpush1.bf16.msra.mxu0 0
    %751 = vmatprep.subr.bf16.mxu0 0
    %752 = vmatpush1.bf16.msra.mxu0 0
    %753 = vmatprep.subr.bf16.mxu0 0
    %754 = vmatpush1.bf16.msra.mxu0 0
    %755 = vmatprep.subr.bf16.mxu0 0
    %756 = vmatpush1.bf16.msra.mxu0 0
    %757 = vmatprep.subr.bf16.mxu0 0
    %758 = vmatpush1.bf16.msra.mxu0 0
    %759 = vmatprep.subr.bf16.mxu0 0
    %760 = vmatpush1.bf16.msra.mxu0 0
    %761 = vmatprep.mubr.bf16.mxu0 0
    %762 = vmatmul.mubr.bf16.gmra.mrb[0].mxu0 %v727
    %v763 = vpop.f32.mrb[0].mxu0
    %v764 = vadd.f32 %v711, %v763
    %v765 = vpop.f32.mrb[0].mxu0
    %v766 = vpop.f32.mrb[0].mxu0
    %v767 = vpop.f32.mrb[0].mxu0
    %768 = vdwg.mxu0
    %vm769 = vcmp.gt.f32.partialorder %v764, 0.0
    %v770 = vmul.f32 %v764, 0.01
    %v771 = vsel %vm769, %v764, %v770
    %v772 = vpack.c.bf16 %v771, %v771
    %v773 = vld [vmem:[%s7] sm:$0xf]
    %v774 = vld [vmem:[%s7 + $0x4] sm:$0xf]
    %v775 = vld [vmem:[%s8] sm:$0x1]
    %v777 = vlaneseq
    %v778 = vshrl.u32 %v777, 7
    %v779 = vsub.s32 0, %v778
    %v780 = vrot.slane %v775, %v779
    %v784 = vunpack.c.l.b16 %v773
    %v785 = vunpack.c.l.b16 %v774
    %v786 = vpack.c.b16 %v785, %v784
    %v789 = vsel %vm447, %v772, 0
    %791 = vmatprep.subr.bf16.mxu0 0
    %792 = vmatpush1.bf16.msra.mxu0 %v786
    %793 = vmatprep.subr.bf16.mxu0 0
    %794 = vmatpush1.bf16.msra.mxu0 0
    %795 = vmatprep.subr.bf16.mxu0 0
    %796 = vmatpush1.bf16.msra.mxu0 0
    %797 = vmatprep.subr.bf16.mxu0 0
    %798 = vmatpush1.bf16.msra.mxu0 0
    %799 = vmatprep.subr.bf16.mxu0 0
    %800 = vmatpush1.bf16.msra.mxu0 0
    %801 = vmatprep.subr.bf16.mxu0 0
    %802 = vmatpush1.bf16.msra.mxu0 0
    %803 = vmatprep.subr.bf16.mxu0 0
    %804 = vmatpush1.bf16.msra.mxu0 0
    %805 = vmatprep.subr.bf16.mxu0 0
    %806 = vmatpush1.bf16.msra.mxu0 0
    %807 = vmatprep.subr.bf16.mxu0 0
    %808 = vmatpush1.bf16.msra.mxu0 0
    %809 = vmatprep.subr.bf16.mxu0 0
    %810 = vmatpush1.bf16.msra.mxu0 0
    %811 = vmatprep.subr.bf16.mxu0 0
    %812 = vmatpush1.bf16.msra.mxu0 0
    %813 = vmatprep.subr.bf16.mxu0 0
    %814 = vmatpush1.bf16.msra.mxu0 0
    %815 = vmatprep.subr.bf16.mxu0 0
    %816 = vmatpush1.bf16.msra.mxu0 0
    %817 = vmatprep.subr.bf16.mxu0 0
    %818 = vmatpush1.bf16.msra.mxu0 0
    %819 = vmatprep.subr.bf16.mxu0 0
    %820 = vmatpush1.bf16.msra.mxu0 0
    %821 = vmatprep.subr.bf16.mxu0 0
    %822 = vmatpush1.bf16.msra.mxu0 0
    %823 = vmatprep.mubr.bf16.mxu0 0
    %824 = vmatmul.mubr.bf16.gmra.mrb[0].mxu0 %v789
    %v825 = vpop.f32.mrb[0].mxu0
    %v826 = vadd.f32 %v780, %v825
    %v827 = vpop.f32.mrb[0].mxu0
    %v828 = vpop.f32.mrb[0].mxu0
    %v829 = vpop.f32.mrb[0].mxu0
    %830 = vdwg.mxu0
    %v831 = vlaneseq
    %v832 = vand.u32 %v831, 127
    %vm833 = vcmp.lt.s32.totalorder %v832, 10
    %v834 = vsel %vm833, %v826, -1e+30
    %835 = vmax.xlane.f32.xlu0 %v834
    %v836 = vpop.xlane.xlu0 %835
    %v837 = vsub.f32 %v826, %v836
    %v838 = vmul.f32 %v837, 1.442695
    %v839 = vpow.pop %v838
    %v840 = vsel %vm833, %v839, 0.0
    %841 = vadd.xlane.f32.xlu0 %v840
    %v842 = vpop.xlane.xlu0 %841
    %v843 = vrcp.pop %v842
    %v844 = vmul.f32 %v840, %v843
    %845 = vst [vmem:[#allocation2] sm:$0xff] %v844
    // Predicated region
    $region38: #{tpu_custom_call.1} parent=1 // pred_check
      _
    $region39: #{tpu_custom_call.1} parent=1 // pred_check_branch
      %847 = sbr.rel (0) target = $region41
    $region40: #{tpu_custom_call.1} parent=1 // pred_region
      %s849 = ssub.s32 128, 128
      %850 = vsyncadd [#allocation3], %s849
      %s852 = sshll.u32 [#allocation2], 4
      %s853 = int_to_ptr.vmem [resolvable:$true] %s852
      %855 = dma.vmem_to_hbm [thread:$0]  %s853, 128, %s9, [#allocation3]
    $region41: #{tpu_custom_call.1} parent=1 // pred_fallthru
      _
    // Predicated region
    $region42: #{tpu_custom_call.1} parent=1 // pred_check
      _
    $region43: #{tpu_custom_call.1} parent=1 // pred_check_branch
      %857 = sbr.rel (0) target = $region45
    $region44: #{tpu_custom_call.1} parent=1 // pred_region
      %858 = dma.done [#allocation3], 128
    $region45: #{tpu_custom_call.1} parent=1 // pred_fallthru
      _
    %859 = vsyncpa [#allocation3], 1

</llo_original>
